<compile_context>
chip_gen: v7x
topology: tpu7x:2x2x1
jax: 0.10.0
libtpu: 0.0.40
codegen_flags: <defaults>
</compile_context>

<pallas_src>
import functools
import math

import jax
import jax.numpy as jnp
from jax.experimental import pallas as pl
from jax.experimental.pallas import tpu as pltpu

# MXU input dtype: bf16 inputs + f32 accumulation run at native MXU rate on all
# generations (f32 x f32 is emulated with multiple bf16 passes).
_MXU_DTYPE = jnp.bfloat16


# ----------------------------------------------------------------------------- helpers
def _round_up(x, m):
    return ((x + m - 1) // m) * m


def _choose_row_tile(rows, per_row_bytes, fixed_bytes=0, *, vmem_budget=24 << 20,
                     max_rows=1024, mxu_align=True, min_blocks=2):
    """Pick a row tile that (a) is a multiple of 8, (b) exactly divides the 8-aligned
    row count (so no wrapper-side pad/slice when rows % 8 == 0), (c) fits a VMEM budget
    that already accounts for grid-invariant blocks (weights), (d) prefers multiples of
    256 (MXU width on v6e/v7x) and (e) leaves >= min_blocks grid blocks so v7x can
    shard the parallel axis across both TensorCores."""
    rows8 = _round_up(rows, 8)
    avail = max(vmem_budget - fixed_bytes, 2 << 20)
    cap = min(avail // max(per_row_bytes, 1), max_rows, rows8)
    cap = max(8, (cap // 8) * 8)
    if min_blocks > 1 and rows8 >= min_blocks * 8:
        cap = min(cap, max(8, ((rows8 // min_blocks) // 8) * 8))
    steps = (256, 128, 8) if mxu_align else (8,)
    for step in steps:
        t = (cap // step) * step
        while t >= step:
            if rows8 % t == 0:
                return t, rows8
            t -= step
    return 8, rows8


def _maybe_pad_rows(x2, rows_pad):
    rows = x2.shape[0]
    if rows == rows_pad:
        return x2
    return jnp.pad(x2, ((0, rows_pad - rows), (0, 0)))


def _compiler_params(semantics, vmem_estimate_bytes=None):
    kwargs = dict(dimension_semantics=semantics)
    if vmem_estimate_bytes is not None:
        # Explicit scoped-VMEM limit (v5e defaults to only 16 MiB). Generous headroom,
        # capped below v7x's 64 MiB physical VMEM.
        kwargs["vmem_limit_bytes"] = int(
            min(max(2 * vmem_estimate_bytes + (8 << 20), 32 << 20), 56 << 20))
    return pltpu.CompilerParams(**kwargs)


def _fast_reciprocal(d):
    # EUP approximate reciprocal (separate, otherwise-idle VLIW slot) + one Newton step.
    inv = pl.reciprocal(d, approx=True)
    return inv * (2.0 - d * inv)


def _layer_norm_f32(x, gamma, beta, eps, inv_nm1):
    # torch-variant LayerNorm: unbiased std, eps added to the std (not the variance).
    mean = jnp.mean(x, axis=-1, keepdims=True)
    diff = x - mean
    var = jnp.sum(diff * diff, axis=-1, keepdims=True) * inv_nm1
    inv = _fast_reciprocal(jnp.sqrt(var) + eps)
    return gamma * diff * inv + beta


# ----------------------------------------------------------------------------- kernels
def _ln_qkv_kernel(x_ref, g_ref, b_ref, w_ref, bias_ref, o_ref, *, eps, inv_nm1):
    """Fused LayerNorm1 + packed QKV projection: out = LN(x) @ W_qkv + b_qkv."""
    x = x_ref[...].astype(jnp.float32)
    n = _layer_norm_f32(x, g_ref[...].astype(jnp.float32),
                        b_ref[...].astype(jnp.float32), eps, inv_nm1)
    y = jnp.dot(n.astype(_MXU_DTYPE), w_ref[...].astype(_MXU_DTYPE),
                preferred_element_type=jnp.float32)
    o_ref[...] = (y + bias_ref[...].astype(jnp.float32)).astype(o_ref.dtype)


def _attention_kernel(qkv_ref, m_ref, o_ref, *, n_heads, dk, scale):
    """Per-batch masked softmax(QK^T/sqrt(dk)) @ V for all heads, packed QKV layout.
    Output is written as one lane-dense (S, D) block (no head transposes)."""
    qkv = qkv_ref[0]                                   # (S, 3D)
    D = n_heads * dk
    # Additive mask bias, computed once per block.
    bias = jnp.where(m_ref[0] == 0.0, jnp.float32(-1e9), jnp.float32(0.0))   # (1, S)
    outs = []
    for h in range(n_heads):
        q = qkv[:, h * dk:(h + 1) * dk].astype(jnp.float32) * scale
        k = qkv[:, D + h * dk:D + (h + 1) * dk]
        v = qkv[:, 2 * D + h * dk:2 * D + (h + 1) * dk]
        s = jax.lax.dot_general(q.astype(_MXU_DTYPE), k.astype(_MXU_DTYPE),
                                (((1,), (1,)), ((), ())),
                                preferred_element_type=jnp.float32)           # (S, S)
        s = s + bias
        s = s - jnp.max(s, axis=-1, keepdims=True)
        p = jnp.exp(s)
        p = p * _fast_reciprocal(jnp.sum(p, axis=-1, keepdims=True))
        outs.append(jnp.dot(p.astype(_MXU_DTYPE), v.astype(_MXU_DTYPE),
                            preferred_element_type=jnp.float32))              # (S, dk)
    o_ref[0] = jnp.concatenate(outs, axis=-1).astype(o_ref.dtype)


def _attn_out_residual_ln_kernel(c_ref, w_ref, b_ref, x_ref, g_ref, be_ref,
                                 h_ref, n_ref, *, eps, inv_nm1):
    """Fused: h1 = ctx @ W_o + b_o + x ;  n2 = LayerNorm2(h1). Emits both."""
    y = jnp.dot(c_ref[...].astype(_MXU_DTYPE), w_ref[...].astype(_MXU_DTYPE),
                preferred_element_type=jnp.float32)
    h = y + b_ref[...].astype(jnp.float32) + x_ref[...].astype(jnp.float32)
    h_ref[...] = h.astype(h_ref.dtype)
    n_ref[...] = _layer_norm_f32(h, g_ref[...].astype(jnp.float32),
                                 be_ref[...].astype(jnp.float32),
                                 eps, inv_nm1).astype(n_ref.dtype)


def _make_rowtile_linear_kernel(relu, has_residual):
    def _epilogue(y, b, r):
        y = y + b
        if relu:
            y = jnp.maximum(y, 0.0)
        if r is not None:
            y = y + r
        return y

    if has_residual:
        def kernel(x_ref, w_ref, b_ref, r_ref, o_ref):
            y = jnp.dot(x_ref[...].astype(_MXU_DTYPE), w_ref[...].astype(_MXU_DTYPE),
                        preferred_element_type=jnp.float32)
            o_ref[...] = _epilogue(y, b_ref[...].astype(jnp.float32),
                                   r_ref[...].astype(jnp.float32)).astype(o_ref.dtype)
    else:
        def kernel(x_ref, w_ref, b_ref, o_ref):
            y = jnp.dot(x_ref[...].astype(_MXU_DTYPE), w_ref[...].astype(_MXU_DTYPE),
                        preferred_element_type=jnp.float32)
            o_ref[...] = _epilogue(y, b_ref[...].astype(jnp.float32),
                                   None).astype(o_ref.dtype)
    return kernel


def _make_ktiled_linear_kernel(relu, has_residual):
    def _epilogue(acc, b, r):
        y = acc + b
        if relu:
            y = jnp.maximum(y, 0.0)
        if r is not None:
            y = y + r
        return y

    def _step(x_ref, w_ref, acc_ref):
        @pl.when(pl.program_id(1) == 0)
        def _():
            acc_ref[...] = jnp.zeros_like(acc_ref)
        acc_ref[...] += jnp.dot(x_ref[...].astype(_MXU_DTYPE),
                                w_ref[...].astype(_MXU_DTYPE),
                                preferred_element_type=jnp.float32)

    if has_residual:
        def kernel(x_ref, w_ref, b_ref, r_ref, o_ref, acc_ref):
            _step(x_ref, w_ref, acc_ref)

            @pl.when(pl.program_id(1) == pl.num_programs(1) - 1)
            def _():
                o_ref[...] = _epilogue(acc_ref[...], b_ref[...].astype(jnp.float32),
                                       r_ref[...].astype(jnp.float32)).astype(o_ref.dtype)
    else:
        def kernel(x_ref, w_ref, b_ref, o_ref, acc_ref):
            _step(x_ref, w_ref, acc_ref)

            @pl.when(pl.program_id(1) == pl.num_programs(1) - 1)
            def _():
                o_ref[...] = _epilogue(acc_ref[...], b_ref[...].astype(jnp.float32),
                                       None).astype(o_ref.dtype)
    return kernel


# ----------------------------------------------------------------------------- wrappers
def ln_qkv_proj(x2, gamma, beta, w_qkv, b_qkv, eps=1e-6):
    """out = LayerNorm1(x2) @ W_qkv + b_qkv in one fused pass. x2: (rows, D)."""
    rows, D = x2.shape
    N = w_qkv.shape[1]
    fixed = 2 * D * N * 4 + 4 * N + 2 * D * 4          # weight (dbl-buffered) + vectors
    per_row = 2 * 4 * (D + N)                           # in + out, double-buffered
    tr, rows_pad = _choose_row_tile(rows, per_row, fixed)
    inv_nm1 = 1.0 / (D - 1) if D > 1 else float("inf")
    out = pl.pallas_call(
        functools.partial(_ln_qkv_kernel, eps=float(eps), inv_nm1=inv_nm1),
        out_shape=jax.ShapeDtypeStruct((rows_pad, N), x2.dtype),
        grid_spec=pltpu.PrefetchScalarGridSpec(
            num_scalar_prefetch=0,
            grid=(rows_pad // tr,),
            in_specs=[
                pl.BlockSpec((tr, D), lambda i: (i, 0)),
                pl.BlockSpec((1, D), lambda i: (0, 0)),
                pl.BlockSpec((1, D), lambda i: (0, 0)),
                pl.BlockSpec((D, N), lambda i: (0, 0)),
                pl.BlockSpec((1, N), lambda i: (0, 0)),
            ],
            out_specs=pl.BlockSpec((tr, N), lambda i: (i, 0)),
        ),
        compiler_params=_compiler_params(("parallel",), fixed + tr * per_row),
    )(_maybe_pad_rows(x2, rows_pad), gamma.reshape(1, D), beta.reshape(1, D),
      w_qkv, b_qkv.reshape(1, N))
    return out[:rows] if rows_pad != rows else out


def attention_core(qkv, mask, *, n_heads):
    """Masked multi-head attention on the packed projection. qkv: (B, S, 3D),
    mask: (B, 1, S). Returns ctx (B, S, D) already in [S, heads*dk] layout."""
    B, S, threeD = qkv.shape
    D = threeD // 3
    dk = D // n_heads
    return pl.pallas_call(
        functools.partial(_attention_kernel, n_heads=n_heads, dk=dk,
                          scale=1.0 / math.sqrt(dk)),
        out_shape=jax.ShapeDtypeStruct((B, S, D), qkv.dtype),
        grid_spec=pltpu.PrefetchScalarGridSpec(
            num_scalar_prefetch=0,
            grid=(B,),
            in_specs=[pl.BlockSpec((1, S, threeD), lambda b: (b, 0, 0)),
                      pl.BlockSpec((1, 1, S), lambda b: (b, 0, 0))],
            out_specs=pl.BlockSpec((1, S, D), lambda b: (b, 0, 0)),
        ),
        compiler_params=pltpu.CompilerParams(dimension_semantics=("parallel",)),
    )(qkv, mask)


def attn_out_residual_ln(ctx2, wo, bo, x2, gamma, beta, eps=1e-6):
    """Fused W_o projection + residual + LayerNorm2: returns (h1, n2) where
    h1 = ctx2 @ wo + bo + x2 and n2 = LN2(h1)."""
    rows, D = ctx2.shape
    fixed = 2 * D * D * 4 + 3 * 4 * D
    per_row = 2 * 4 * (4 * D)                           # ctx in, x in, h1 out, n2 out
    tr, rows_pad = _choose_row_tile(rows, per_row, fixed)
    inv_nm1 = 1.0 / (D - 1) if D > 1 else float("inf")
    row_spec = pl.BlockSpec((tr, D), lambda i: (i, 0))
    vec_spec = pl.BlockSpec((1, D), lambda i: (0, 0))
    h1, n2 = pl.pallas_call(
        functools.partial(_attn_out_residual_ln_kernel, eps=float(eps), inv_nm1=inv_nm1),
        out_shape=(jax.ShapeDtypeStruct((rows_pad, D), x2.dtype),
                   jax.ShapeDtypeStruct((rows_pad, D), x2.dtype)),
        grid_spec=pltpu.PrefetchScalarGridSpec(
            num_scalar_prefetch=0,
            grid=(rows_pad // tr,),
            in_specs=[row_spec, pl.BlockSpec((D, D), lambda i: (0, 0)), vec_spec,
                      row_spec, vec_spec, vec_spec],
            out_specs=[row_spec, row_spec],
        ),
        compiler_params=_compiler_params(("parallel",), fixed + tr * per_row),
    )(_maybe_pad_rows(ctx2, rows_pad), wo, bo.reshape(1, D),
      _maybe_pad_rows(x2, rows_pad), gamma.reshape(1, D), beta.reshape(1, D))
    if rows_pad != rows:
        h1, n2 = h1[:rows], n2[:rows]
    return h1, n2


def linear(x2, w, b, *, relu=False, residual=None, k_block=None):
    """y = x2 @ w + b [, ReLU][, + residual] with bf16 MXU inputs / f32 accumulation.
    Small K keeps the whole (K, N) weight VMEM-resident; very wide K falls back to a
    K-axis ('arbitrary') grid with a VMEM f32 accumulator."""
    rows, K = x2.shape
    N = w.shape[1]
    has_res = residual is not None

    # Auto-enable K tiling when the resident weight block would pressure VMEM.
    if k_block is None and K * N * 4 > (12 << 20) and K % 128 == 0:
        for cand in (512, 256, 128):
            if K % cand == 0:
                k_block = cand
                break
    use_ktile = k_block is not None and K % k_block == 0 and k_block < K

    if use_ktile:
        fixed = 2 * k_block * N * 4 + 4 * N
        per_row = 2 * 4 * k_block + 2 * 4 * N + 4 * N + (2 * 4 * N if has_res else 0)
    else:
        fixed = 2 * K * N * 4 + 4 * N
        per_row = 2 * 4 * K + 2 * 4 * N + (2 * 4 * N if has_res else 0)

    tr, rows_pad = _choose_row_tile(rows, per_row, fixed, max_rows=512)
    xp = _maybe_pad_rows(x2, rows_pad)
    b2 = b.reshape(1, N)
    vmem_est = fixed + tr * per_row

    if use_ktile:
        in_specs = [pl.BlockSpec((tr, k_block), lambda i, k: (i, k)),
                    pl.BlockSpec((k_block, N), lambda i, k: (k, 0)),
                    pl.BlockSpec((1, N), lambda i, k: (0, 0))]
        args = [xp, w, b2]
        if has_res:
            in_specs.append(pl.BlockSpec((tr, N), lambda i, k: (i, 0)))
            args.append(_maybe_pad_rows(residual, rows_pad))
        out = pl.pallas_call(
            _make_ktiled_linear_kernel(relu, has_res),
            out_shape=jax.ShapeDtypeStruct((rows_pad, N), x2.dtype),
            grid_spec=pltpu.PrefetchScalarGridSpec(
                num_scalar_prefetch=0,
                grid=(rows_pad // tr, K // k_block),
                in_specs=in_specs,
                out_specs=pl.BlockSpec((tr, N), lambda i, k: (i, 0)),
                scratch_shapes=[pltpu.VMEM((tr, N), jnp.float32)],
            ),
            compiler_params=_compiler_params(("parallel", "arbitrary"), vmem_est),
        )(*args)
    else:
        in_specs = [pl.BlockSpec((tr, K), lambda i: (i, 0)),
                    pl.BlockSpec((K, N), lambda i: (0, 0)),
                    pl.BlockSpec((1, N), lambda i: (0, 0))]
        args = [xp, w, b2]
        if has_res:
            in_specs.append(pl.BlockSpec((tr, N), lambda i: (i, 0)))
            args.append(_maybe_pad_rows(residual, rows_pad))
        out = pl.pallas_call(
            _make_rowtile_linear_kernel(relu, has_res),
            out_shape=jax.ShapeDtypeStruct((rows_pad, N), x2.dtype),
            grid_spec=pltpu.PrefetchScalarGridSpec(
                num_scalar_prefetch=0,
                grid=(rows_pad // tr,),
                in_specs=in_specs,
                out_specs=pl.BlockSpec((tr, N), lambda i: (i, 0)),
            ),
            compiler_params=_compiler_params(("parallel",), vmem_est),
        )(*args)
    return out[:rows] if rows_pad != rows else out


# ----------------------------------------------------------------------------- encoder layer
def encoder_layer_forward(params, x, mask, n_heads, eps=1e-6):
    B, S, D = x.shape
    x2 = x.reshape(B * S, D)

    # ---- sublayer 0: fused LN1 + packed QKV projection, transposeless attention,
    #      fused W_o + residual + LN2 ----
    wq, bq = params["wq"]
    wk, bk = params["wk"]
    wv, bv = params["wv"]
    w_qkv = jnp.concatenate([wq, wk, wv], axis=1)      # (D, 3D) — weight-only, tiny
    b_qkv = jnp.concatenate([bq, bk, bv], axis=0)      # (3D,)

    qkv = ln_qkv_proj(x2, *params["ln1"], w_qkv, b_qkv, eps=eps)      # (B*S, 3D)
    ctx = attention_core(qkv.reshape(B, S, 3 * D), mask, n_heads=n_heads)   # (B, S, D)
    h1, n2 = attn_out_residual_ln(ctx.reshape(B * S, D), *params["wo"],
                                  x2, *params["ln2"], eps=eps)

    # ---- sublayer 1: feed-forward; final residual fused into the second matmul ----
    f1 = linear(n2, *params["w1"], relu=True)
    out = linear(f1, *params["w2"], residual=h1)
    return out.reshape(B, S, D)


def encoder_layer_reference(params, x, mask, n_heads, eps=1e-6):
    """Pure-JAX f32 reference matching the torch module semantics."""
    B, S, D = x.shape
    H = n_heads
    dk = D // H
    hi = jax.lax.Precision.HIGHEST

    def ln(t, g, b):
        mean = jnp.mean(t, axis=-1, keepdims=True)
        diff = t - mean
        var = jnp.sum(diff * diff, axis=-1, keepdims=True) / (t.shape[-1] - 1)
        return g * diff / (jnp.sqrt(var) + eps) + b

    def lin(t, wb):
        w, b = wb
        return jnp.dot(t, w, precision=hi) + b

    n1 = ln(x, *params["ln1"])
    q = lin(n1, params["wq"]).reshape(B, S, H, dk).transpose(0, 2, 1, 3)
    k = lin(n1, params["wk"]).reshape(B, S, H, dk).transpose(0, 2, 1, 3)
    v = lin(n1, params["wv"]).reshape(B, S, H, dk).transpose(0, 2, 1, 3)
    scores = jnp.einsum("bhqd,bhkd->bhqk", q, k, precision=hi) / math.sqrt(dk)
    scores = jnp.where(mask[:, :, None, :] == 0, -1e9, scores)
    p = jax.nn.softmax(scores, axis=-1)
    ctx = jnp.einsum("bhqk,bhkd->bhqd", p, v,
                     precision=hi).transpose(0, 2, 1, 3).reshape(B, S, D)
    h1 = x + lin(ctx, params["wo"])
    n2 = ln(h1, *params["ln2"])
    f = lin(jax.nn.relu(lin(n2, params["w1"])), params["w2"])
    return h1 + f


def init_params(key, d_model, n_heads, d_ff):
    def linear_init(k, fan_in, fan_out):
        kw, kb = jax.random.split(k)
        bound = 1.0 / math.sqrt(fan_in)
        w = jax.random.uniform(kw, (fan_in, fan_out), jnp.float32, -bound, bound)
        b = jax.random.uniform(kb, (fan_out,), jnp.float32, -bound, bound)
        return w, b

    keys = jax.random.split(key, 6)
    ones = jnp.ones((d_model,), jnp.float32)
    zeros = jnp.zeros((d_model,), jnp.float32)
    return {
        "wq": linear_init(keys[0], d_model, d_model),
        "wk": linear_init(keys[1], d_model, d_model),
        "wv": linear_init(keys[2], d_model, d_model),
        "wo": linear_init(keys[3], d_model, d_model),
        "w1": linear_init(keys[4], d_model, d_ff),
        "w2": linear_init(keys[5], d_ff, d_model),
        "ln1": (ones, zeros),
        "ln2": (ones, zeros),
    }


if __name__ == "__main__":
    B, S, D, H, DFF = 2, 8, 32, 4, 64
    key = jax.random.PRNGKey(0)
    kx, kp, k1, k2, k3 = jax.random.split(key, 5)

    x = jax.random.normal(kx, (B, S, D), dtype=jnp.float32)
    params = init_params(kp, D, H, DFF)
    lengths = jnp.array([S, S - 2])
    mask = (jnp.arange(S)[None, None, :] < lengths[:, None, None]).astype(jnp.float32)  # (B,1,S)

    out = encoder_layer_forward(params, x, mask, n_heads=H, eps=1e-6)
    out = jax.block_until_ready(out)

    ref = encoder_layer_reference(params, x, mask, n_heads=H, eps=1e-6)
    assert out.shape == x.shape and out.dtype == x.dtype
    max_err = float(jnp.max(jnp.abs(out - ref)))
    # bf16 MXU inputs (f32 accumulation) vs an f32 HIGHEST-precision reference:
    # expect ~1e-2-level deviations, so tolerance is 5e-2.
    assert jnp.allclose(out, ref, atol=5e-2, rtol=5e-2), f"mismatch vs reference, max|err|={max_err}"

    # Exercise the K-tiled ("arbitrary" reduction axis + VMEM accumulator) linear path.
    xa = jax.random.normal(k1, (16, 256), dtype=jnp.float32)
    wa = jax.random.normal(k2, (256, 128), dtype=jnp.float32) * 0.05
    ba = jax.random.normal(k3, (128,), dtype=jnp.float32) * 0.1
    ra = jnp.ones((16, 128), jnp.float32)
    ya = jax.block_until_ready(linear(xa, wa, ba, relu=True, k_block=128))
    yb = jax.block_until_ready(linear(xa, wa, ba, residual=ra, k_block=128))
    y_ref = jnp.dot(xa, wa, precision=jax.lax.Precision.HIGHEST) + ba
    assert jnp.allclose(ya, jnp.maximum(y_ref, 0.0), atol=5e-2, rtol=5e-2)
    assert jnp.allclose(yb, y_ref + ra, atol=5e-2, rtol=5e-2)

    print("KERNEL_OK")
</pallas_src>

<mosaic_0001>
module attributes {stable_mosaic.version = 11 : i64} {
  func.func @_ln_qkv_kernel(%arg0: i32, %arg1: memref<8x32xf32, #tpu.memory_space<vmem>>, %arg2: memref<1x32xf32, #tpu.memory_space<vmem>>, %arg3: memref<1x32xf32, #tpu.memory_space<vmem>>, %arg4: memref<32x96xf32, #tpu.memory_space<vmem>>, %arg5: memref<1x96xf32, #tpu.memory_space<vmem>>, %arg6: memref<8x96xf32, #tpu.memory_space<vmem>>) attributes {dimension_semantics = [#tpu.dimension_semantics<parallel>], iteration_bounds = array<i64: 2>, scalar_prefetch = 0 : i64, scratch_operands = 0 : i64, tpu.core_type = #tpu.core_type<tc>, window_params = [{transform_indices = @transform_0, window_bounds = array<i64: 8, 32>}, {pipeline_mode = #tpu.pipeline_mode<synchronous>, transform_indices = @transform_1, window_bounds = array<i64: 1, 32>}, {pipeline_mode = #tpu.pipeline_mode<synchronous>, transform_indices = @transform_2, window_bounds = array<i64: 1, 32>}, {pipeline_mode = #tpu.pipeline_mode<synchronous>, transform_indices = @transform_3, window_bounds = array<i64: 32, 96>}, {pipeline_mode = #tpu.pipeline_mode<synchronous>, transform_indices = @transform_4, window_bounds = array<i64: 1, 96>}, {transform_indices = @transform_5, window_bounds = array<i64: 8, 96>}]} {
    %c0 = arith.constant 0 : index
    %c0_0 = arith.constant 0 : index
    %0 = vector.load %arg1[%c0, %c0_0] : memref<8x32xf32, #tpu.memory_space<vmem>>, vector<8x32xf32>
    %c0_1 = arith.constant 0 : index
    %c0_2 = arith.constant 0 : index
    %1 = vector.load %arg2[%c0_1, %c0_2] : memref<1x32xf32, #tpu.memory_space<vmem>>, vector<1x32xf32>
    %c0_3 = arith.constant 0 : index
    %c0_4 = arith.constant 0 : index
    %2 = vector.load %arg3[%c0_3, %c0_4] : memref<1x32xf32, #tpu.memory_space<vmem>>, vector<1x32xf32>
    %cst = arith.constant dense<0.000000e+00> : vector<8xf32>
    %3 = vector.multi_reduction <add>, %0, %cst [1] : vector<8x32xf32> to vector<8xf32>
    %4 = vector.shape_cast %3 : vector<8xf32> to vector<8x1xf32>
    %cst_5 = arith.constant 3.200000e+01 : f32
    %5 = vector.broadcast %cst_5 : f32 to vector<8x1xf32>
    %6 = arith.divf %4, %5 : vector<8x1xf32>
    %7 = vector.broadcast %6 : vector<8x1xf32> to vector<8x32xf32>
    %8 = arith.subf %0, %7 : vector<8x32xf32>
    %9 = arith.mulf %8, %8 : vector<8x32xf32>
    %cst_6 = arith.constant dense<0.000000e+00> : vector<8xf32>
    %10 = vector.multi_reduction <add>, %9, %cst_6 [1] : vector<8x32xf32> to vector<8xf32>
    %11 = vector.shape_cast %10 : vector<8xf32> to vector<8x1xf32>
    %cst_7 = arith.constant 0.0322580636 : f32
    %12 = vector.broadcast %cst_7 : f32 to vector<8x1xf32>
    %13 = arith.mulf %11, %12 : vector<8x1xf32>
    %14 = math.sqrt %13 : vector<8x1xf32>
    %cst_8 = arith.constant 9.99999997E-7 : f32
    %15 = vector.broadcast %cst_8 : f32 to vector<8x1xf32>
    %16 = arith.addf %14, %15 : vector<8x1xf32>
    %17 = tpu.reciprocal %16 {approx = true} : vector<8x1xf32> -> vector<8x1xf32>
    %18 = arith.mulf %16, %17 : vector<8x1xf32>
    %cst_9 = arith.constant 2.000000e+00 : f32
    %19 = vector.broadcast %cst_9 : f32 to vector<8x1xf32>
    %20 = arith.subf %19, %18 : vector<8x1xf32>
    %21 = arith.mulf %17, %20 : vector<8x1xf32>
    %22 = vector.broadcast %1 : vector<1x32xf32> to vector<8x32xf32>
    %23 = arith.mulf %22, %8 : vector<8x32xf32>
    %24 = vector.broadcast %21 : vector<8x1xf32> to vector<8x32xf32>
    %25 = arith.mulf %23, %24 : vector<8x32xf32>
    %26 = vector.broadcast %2 : vector<1x32xf32> to vector<8x32xf32>
    %27 = arith.addf %25, %26 : vector<8x32xf32>
    %28 = arith.truncf %27 : vector<8x32xf32> to vector<8x32xbf16>
    %c0_10 = arith.constant 0 : index
    %c0_11 = arith.constant 0 : index
    %29 = vector.load %arg4[%c0_10, %c0_11] : memref<32x96xf32, #tpu.memory_space<vmem>>, vector<32x96xf32>
    %30 = arith.truncf %29 : vector<32x96xf32> to vector<32x96xbf16>
    %cst_12 = arith.constant dense<0.000000e+00> : vector<8x96xf32>
    %31 = tpu.matmul %28, %30, %cst_12 {dimension_numbers = #tpu.dot_dimension_numbers<[1], [0], [0], [1], [0, 0, 1, 1], [], []>} : vector<8x32xbf16>, vector<32x96xbf16>, vector<8x96xf32> -> vector<8x96xf32>
    %c0_13 = arith.constant 0 : index
    %c0_14 = arith.constant 0 : index
    %32 = vector.load %arg5[%c0_13, %c0_14] : memref<1x96xf32, #tpu.memory_space<vmem>>, vector<1x96xf32>
    %33 = vector.broadcast %32 : vector<1x96xf32> to vector<8x96xf32>
    %34 = arith.addf %31, %33 : vector<8x96xf32>
    %c0_15 = arith.constant 0 : index
    %c0_16 = arith.constant 0 : index
    %35 = vector.load %arg6[%c0_15, %c0_16] : memref<8x96xf32, #tpu.memory_space<vmem>>, vector<8x96xf32>
    tpu.vector_store %arg6[%c0_15, %c0_16], %34 {strides = array<i32>} : memref<8x96xf32, #tpu.memory_space<vmem>>, vector<8x96xf32>,
    return
  }
  func.func @transform_0(%arg0: i32) -> (i32, i32) {
    %c0_i32 = arith.constant 0 : i32
    %c0_i32_0 = arith.constant 0 : i32
    return %arg0, %c0_i32 : i32, i32
  }
  func.func @transform_1(%arg0: i32) -> (i32, i32) {
    %c0_i32 = arith.constant 0 : i32
    %c0_i32_0 = arith.constant 0 : i32
    %c0_i32_1 = arith.constant 0 : i32
    return %c0_i32, %c0_i32_0 : i32, i32
  }
  func.func @transform_2(%arg0: i32) -> (i32, i32) {
    %c0_i32 = arith.constant 0 : i32
    %c0_i32_0 = arith.constant 0 : i32
    %c0_i32_1 = arith.constant 0 : i32
    return %c0_i32, %c0_i32_0 : i32, i32
  }
  func.func @transform_3(%arg0: i32) -> (i32, i32) {
    %c0_i32 = arith.constant 0 : i32
    %c0_i32_0 = arith.constant 0 : i32
    %c0_i32_1 = arith.constant 0 : i32
    return %c0_i32, %c0_i32_0 : i32, i32
  }
  func.func @transform_4(%arg0: i32) -> (i32, i32) {
    %c0_i32 = arith.constant 0 : i32
    %c0_i32_0 = arith.constant 0 : i32
    %c0_i32_1 = arith.constant 0 : i32
    return %c0_i32, %c0_i32_0 : i32, i32
  }
  func.func @transform_5(%arg0: i32) -> (i32, i32) {
    %c0_i32 = arith.constant 0 : i32
    %c0_i32_0 = arith.constant 0 : i32
    return %arg0, %c0_i32 : i32, i32
  }
}

</mosaic_0001>

<llo_original>
// kernel: tpu_custom_call.1
$region0: #{tpu_custom_call.1}
  #allocation0 [shape = 'u32[]', space=smem, size = 0x4, offset = 0x4, fixed_abs, tag = 'smem constant byte address 0x4 - core index']
  #allocation1 [shape = 'u32[144,128]{1,0:T(1,128)}', space=vmem, size = 0x12000, scoped, tag = 'internal scratch']
  %s0 = inlined_call_operand.hbm [shape: f32[16,32], index: 0, kind: input, shape index: {}]
  %s1 = inlined_call_operand.vmem [shape: f32[1,32], index: 1, kind: input, shape index: {}]
  %s2 = inlined_call_operand.vmem [shape: f32[1,32], index: 2, kind: input, shape index: {}]
  %s3 = inlined_call_operand.hbm [shape: f32[32,96], index: 3, kind: input, shape index: {}]
  %s4 = inlined_call_operand.vmem [shape: f32[1,96], index: 4, kind: input, shape index: {}]
  %s5 = inlined_call_operand.hbm [shape: f32[16,96], index: 5, kind: output, shape index: {}]
  %s6 = sld [smem:[#allocation0]]
  $region61: #{tpu_custom_call.1} parent=0
    _
  %s8 = ssub.s32 1, %s6
  %s9 = scalar_select 0, %s8, %s6
  $region1: #{tpu_custom_call.1} parent=0
    #allocation2 [shape = 'u8[8192]{0}', space=vmem, size = 0x2000, scoped, tag = 'input window, operand 0']
    #allocation3 [shape = 's32[2]{0}', space=sflag, size = 0x8, scoped, tag = 'scoped memory for tpu_custom_call.1']
    #allocation4 [shape = 's32[2]{0}', space=sflag, size = 0x8, scoped, tag = 'scoped memory for tpu_custom_call.1']
    #allocation5 [shape = 'u8[16384]{0}', space=vmem, size = 0x4000, scoped, tag = 'input window, operand 3, single buffered']
    #allocation6 [shape = 's32[1]{0}', space=sflag, size = 0x4, scoped, tag = 'scoped memory for tpu_custom_call.1']
    #allocation7 [shape = 'u8[8192]{0}', space=vmem, size = 0x2000, scoped, tag = 'output window, operand 0']
    %10 = vsyncpa [#allocation3], 0
    %s11 = scalar_lea.sflag [#allocation3], 1
    %12 = vsyncpa %s11, 0
    %13 = vsyncpa [#allocation6], 0
    %14 = vsyncpa [#allocation4], 0
    %s15 = scalar_lea.sflag [#allocation4], 1
    %16 = vsyncpa %s15, 0
    loop: start=0, step=1, limit=4
    $region2: #{tpu_custom_call.1} parent=1 // loop_pre_header
      _
    $region3: #{tpu_custom_call.1} parent=1 // loop_header
      %s18 = sphi 0, %s22
      %p19 = scmp.ge.s32.totalorder %s18, 4
      %s28 = sphi 0, %s30
      %s31 = sphi 0, %s28
      %s32 = sphi 0, %s31
      %s48 = sphi 0, %s32
      %s52 = sphi 0, %s52
      %s54 = sphi 0, %s52
      %s55 = sphi 0, %s54
      %s69 = sphi 0, %s55
      %s73 = sphi 0, %s73
      %s75 = sphi 0, %s73
      %s76 = sphi 0, %s75
      %s90 = sphi 0, %s76
      %s94 = sphi 0, %s94
      %s96 = sphi 0, %s94
      %s97 = sphi 0, %s96
      %s111 = sphi 0, %s97
      %s115 = sphi 0, %s115
      %s117 = sphi 0, %s115
      %s118 = sphi 0, %s117
      %s132 = sphi 0, %s118
      %s138 = sphi 0, %s140
      %s141 = sphi 0, %s138
      %s142 = sphi 0, %s141
      %s158 = sphi 0, %s142
    $region4: #{tpu_custom_call.1} parent=1 // loop_header_branch
      %21 = sbr.rel (%p19) target = $region8
    $region5: #{tpu_custom_call.1} parent=1 // loop_body
      %s23 = ssub.s32 %s18, 1
      %s24 = ssub.s32 %s18, 2
      %s25 = sadd.s32 %s18, 1
      %s26 = ssub.s32 %s18, %s25
      %p27 = scmp.eq.s32.totalorder %s26, 0
      %s29 = sadd.s32 %s28, 1
      %s30 = scalar_select %p27, %s28, %s29
      %p33 = pneg %p27
      %p34 = scmp.eq.s32.totalorder %s18, 1
      %p35 = por %p33, %p34
      %p36 = scmp.ne.s32.totalorder %s28, %s31
      %p37 = scmp.eq.s32.totalorder %s18, 0
      %p38 = por %p36, %p37
      %p39 = scmp.ne.s32.totalorder %s28, %s31
      %p40 = scmp.eq.s32.totalorder %s23, 1
      %p41 = por %p39, %p40
      %p42 = scmp.ne.s32.totalorder %s31, %s32
      %p43 = scmp.eq.s32.totalorder %s23, 0
      %p44 = por %p42, %p43
      %p45 = scmp.ne.s32.totalorder %s31, %s32
      %p46 = scmp.eq.s32.totalorder %s24, 1
      %p47 = por %p45, %p46
      %p49 = scmp.ne.s32.totalorder %s32, %s48
      %p50 = scmp.eq.s32.totalorder %s24, 0
      %p51 = por %p49, %p50
      %s53 = sadd.s32 %s52, 1
      %p56 = scmp.eq.s32.totalorder %s18, 1
      %p57 = scmp.ne.s32.totalorder %s52, %s54
      %p58 = scmp.eq.s32.totalorder %s18, 0
      %p59 = por %p57, %p58
      %p60 = scmp.ne.s32.totalorder %s52, %s54
      %p61 = scmp.eq.s32.totalorder %s23, 1
      %p62 = por %p60, %p61
      %p63 = scmp.ne.s32.totalorder %s54, %s55
      %p64 = scmp.eq.s32.totalorder %s23, 0
      %p65 = por %p63, %p64
      %p66 = scmp.ne.s32.totalorder %s54, %s55
      %p67 = scmp.eq.s32.totalorder %s24, 1
      %p68 = por %p66, %p67
      %p70 = scmp.ne.s32.totalorder %s55, %s69
      %p71 = scmp.eq.s32.totalorder %s24, 0
      %p72 = por %p70, %p71
      %s74 = sadd.s32 %s73, 1
      %p77 = scmp.eq.s32.totalorder %s18, 1
      %p78 = scmp.ne.s32.totalorder %s73, %s75
      %p79 = scmp.eq.s32.totalorder %s18, 0
      %p80 = por %p78, %p79
      %p81 = scmp.ne.s32.totalorder %s73, %s75
      %p82 = scmp.eq.s32.totalorder %s23, 1
      %p83 = por %p81, %p82
      %p84 = scmp.ne.s32.totalorder %s75, %s76
      %p85 = scmp.eq.s32.totalorder %s23, 0
      %p86 = por %p84, %p85
      %p87 = scmp.ne.s32.totalorder %s75, %s76
      %p88 = scmp.eq.s32.totalorder %s24, 1
      %p89 = por %p87, %p88
      %p91 = scmp.ne.s32.totalorder %s76, %s90
      %p92 = scmp.eq.s32.totalorder %s24, 0
      %p93 = por %p91, %p92
      %s95 = sadd.s32 %s94, 1
      %p98 = scmp.eq.s32.totalorder %s18, 1
      %p99 = scmp.ne.s32.totalorder %s94, %s96
      %p100 = scmp.eq.s32.totalorder %s18, 0
      %p101 = por %p99, %p100
      %p102 = scmp.ne.s32.totalorder %s94, %s96
      %p103 = scmp.eq.s32.totalorder %s23, 1
      %p104 = por %p102, %p103
      %p105 = scmp.ne.s32.totalorder %s96, %s97
      %p106 = scmp.eq.s32.totalorder %s23, 0
      %p107 = por %p105, %p106
      %p108 = scmp.ne.s32.totalorder %s96, %s97
      %p109 = scmp.eq.s32.totalorder %s24, 1
      %p110 = por %p108, %p109
      %p112 = scmp.ne.s32.totalorder %s97, %s111
      %p113 = scmp.eq.s32.totalorder %s24, 0
      %p114 = por %p112, %p113
      %s116 = sadd.s32 %s115, 1
      %p119 = scmp.eq.s32.totalorder %s18, 1
      %p120 = scmp.ne.s32.totalorder %s115, %s117
      %p121 = scmp.eq.s32.totalorder %s18, 0
      %p122 = por %p120, %p121
      %p123 = scmp.ne.s32.totalorder %s115, %s117
      %p124 = scmp.eq.s32.totalorder %s23, 1
      %p125 = por %p123, %p124
      %p126 = scmp.ne.s32.totalorder %s117, %s118
      %p127 = scmp.eq.s32.totalorder %s23, 0
      %p128 = por %p126, %p127
      %p129 = scmp.ne.s32.totalorder %s117, %s118
      %p130 = scmp.eq.s32.totalorder %s24, 1
      %p131 = por %p129, %p130
      %p133 = scmp.ne.s32.totalorder %s118, %s132
      %p134 = scmp.eq.s32.totalorder %s24, 0
      %p135 = por %p133, %p134
      %s136 = ssub.s32 %s18, %s25
      %p137 = scmp.eq.s32.totalorder %s136, 0
      %s139 = sadd.s32 %s138, 1
      %s140 = scalar_select %p137, %s138, %s139
      %p143 = pneg %p137
      %p144 = scmp.eq.s32.totalorder %s18, 1
      %p145 = por %p143, %p144
      %p146 = scmp.ne.s32.totalorder %s138, %s141
      %p147 = scmp.eq.s32.totalorder %s18, 0
      %p148 = por %p146, %p147
      %p149 = scmp.ne.s32.totalorder %s138, %s141
      %p150 = scmp.eq.s32.totalorder %s23, 1
      %p151 = por %p149, %p150
      %p152 = scmp.ne.s32.totalorder %s141, %s142
      %p153 = scmp.eq.s32.totalorder %s23, 0
      %p154 = por %p152, %p153
      %p155 = scmp.ne.s32.totalorder %s141, %s142
      %p156 = scmp.eq.s32.totalorder %s24, 1
      %p157 = por %p155, %p156
      %p159 = scmp.ne.s32.totalorder %s142, %s158
      %p160 = scmp.eq.s32.totalorder %s24, 0
      %p161 = por %p159, %p160
      %p162 = scmp.le.s32.totalorder 1, %s18
      %p163 = scmp.lt.s32.totalorder %s18, 3
      %p164 = pnand %p162, %p163
      %p165 = pneg %p164
      // Predicated region
      $region9: #{tpu_custom_call.1} parent=5 // pred_check
        _
      $region10: #{tpu_custom_call.1} parent=5 // pred_check_branch
        %167 = sbr.rel (%p164) target = $region12
      $region11: #{tpu_custom_call.1} parent=5 // pred_region
        %s168 = ssub.s32 %s18, 1
        // Predicated region
        $region13: #{tpu_custom_call.1} parent=11 // pred_check
          %p169 = pneg %p65
        $region14: #{tpu_custom_call.1} parent=11 // pred_check_branch
          %171 = sbr.rel (%p169) target = $region16
        $region15: #{tpu_custom_call.1} parent=11 // pred_region
          _
        $region16: #{tpu_custom_call.1} parent=11 // pred_fallthru
          _
        // Predicated region
        $region17: #{tpu_custom_call.1} parent=11 // pred_check
          %p172 = pneg %p86
        $region18: #{tpu_custom_call.1} parent=11 // pred_check_branch
          %174 = sbr.rel (%p172) target = $region20
        $region19: #{tpu_custom_call.1} parent=11 // pred_region
          _
        $region20: #{tpu_custom_call.1} parent=11 // pred_fallthru
          _
        // Predicated region
        $region21: #{tpu_custom_call.1} parent=11 // pred_check
          %p175 = pneg %p107
        $region22: #{tpu_custom_call.1} parent=11 // pred_check_branch
          %177 = sbr.rel (%p175) target = $region24
        $region23: #{tpu_custom_call.1} parent=11 // pred_region
          %s179 = ssub.s32 512, 512
          %180 = vsyncadd [#allocation6], %s179
          %s181 = sshll.u32 [#allocation5], 4
          %s182 = int_to_ptr.vmem [resolvable:$true] %s181
          %187 = dma.hbm_to_vmem [thread:$0]  %s3, 512, %s182, [#allocation6], 128, 128, 8
        $region24: #{tpu_custom_call.1} parent=11 // pred_fallthru
          _
        // Predicated region
        $region25: #{tpu_custom_call.1} parent=11 // pred_check
          %p188 = pneg %p128
        $region26: #{tpu_custom_call.1} parent=11 // pred_check_branch
          %190 = sbr.rel (%p188) target = $region28
        $region27: #{tpu_custom_call.1} parent=11 // pred_region
          _
        $region28: #{tpu_custom_call.1} parent=11 // pred_fallthru
          _
      $region12: #{tpu_custom_call.1} parent=5 // pred_fallthru
        _
      %p191 = scmp.lt.s32.totalorder %s18, 2
      // Predicated region
      $region29: #{tpu_custom_call.1} parent=5 // pred_check
        %p192 = pneg %p191
      $region30: #{tpu_custom_call.1} parent=5 // pred_check_branch
        %194 = sbr.rel (%p192) target = $region32
      $region31: #{tpu_custom_call.1} parent=5 // pred_region
        // Predicated region
        $region33: #{tpu_custom_call.1} parent=31 // pred_check
          %p195 = pneg %p38
        $region34: #{tpu_custom_call.1} parent=31 // pred_check_branch
          %197 = sbr.rel (%p195) target = $region36
        $region35: #{tpu_custom_call.1} parent=31 // pred_region
          %s198 = sand.u32 %s28, 1
          %s199 = scalar_lea.sflag [#allocation3], %s198
          %s200 = sand.u32 %s28, 1
          %s201 = smul.addr %s200, 8
          %s202 = scalar_lea.vmem [#allocation2], %s201
          %s204 = ssub.s32 128, 128
          %205 = vsyncadd %s199, %s204
          %s206 = smul.addr %s18, 128
          %s207 = scalar_lea.hbm %s0, %s206
          %s209 = sshll.u32 %s202, 4
          %s210 = int_to_ptr.vmem [resolvable:$true] %s209
          %212 = dma.hbm_to_vmem [thread:$0]  %s207, 128, %s210, %s199
        $region36: #{tpu_custom_call.1} parent=31 // pred_fallthru
          _
      $region32: #{tpu_custom_call.1} parent=5 // pred_fallthru
        _
      %p213 = scmp.le.s32.totalorder 1, %s18
      %p214 = scmp.lt.s32.totalorder %s18, 3
      %p215 = pnand %p213, %p214
      %p216 = pneg %p215
      // Predicated region
      $region37: #{tpu_custom_call.1} parent=5 // pred_check
        _
      $region38: #{tpu_custom_call.1} parent=5 // pred_check_branch
        %218 = sbr.rel (%p215) target = $region40
      $region39: #{tpu_custom_call.1} parent=5 // pred_region
        %s219 = ssub.s32 %s18, 1
        %s220 = sand.u32 %s31, 1
        %s221 = scalar_lea.sflag [#allocation3], %s220
        %s222 = sand.u32 %s31, 1
        %s223 = smul.addr %s222, 8
        %s224 = scalar_lea.vmem [#allocation2], %s223
        // Predicated region
        $region41: #{tpu_custom_call.1} parent=39 // pred_check
          %p225 = pneg %p44
        $region42: #{tpu_custom_call.1} parent=39 // pred_check_branch
          %227 = sbr.rel (%p225) target = $region44
        $region43: #{tpu_custom_call.1} parent=39 // pred_region
          %228 = dma.done %s221, 128
        $region44: #{tpu_custom_call.1} parent=39 // pred_fallthru
          _
        // Predicated region
        $region45: #{tpu_custom_call.1} parent=39 // pred_check
          %p229 = pneg %p107
        $region46: #{tpu_custom_call.1} parent=39 // pred_check_branch
          %231 = sbr.rel (%p229) target = $region48
        $region47: #{tpu_custom_call.1} parent=39 // pred_region
          %232 = dma.done [#allocation6], 512
        $region48: #{tpu_custom_call.1} parent=39 // pred_fallthru
          _
        %s233 = sand.u32 %s31, 1
        %s234 = scalar_lea.sflag [#allocation3], %s233
        %s235 = sand.u32 %s31, 1
        %s236 = smul.addr %s235, 8
        %s237 = scalar_lea.vmem [#allocation2], %s236
        %p238 = pneg %p44
        %p239 = pneg %p41
        %p240 = pneg %p65
        %p241 = pneg %p62
        %p242 = pneg %p86
        %p243 = pneg %p83
        %p244 = pneg %p107
        %p245 = pneg %p104
        %p246 = pneg %p128
        %p247 = pneg %p125
        %p248 = pneg %p154
        %p249 = pneg %p151
        %s250 = sand.u32 %s141, 1
        %s251 = scalar_lea.sflag [#allocation4], %s250
        %s252 = sand.u32 %s141, 1
        %s253 = smul.addr %s252, 8
        %s254 = scalar_lea.vmem [#allocation7], %s253
        %v256 = vld [vmem:[%s224] sm:$0xff]
        %v257 = vld [vmem:[%s1] sm:$0x1]
        %v258 = vld [vmem:[%s2] sm:$0x1]
        %vm259 = vcmask 261120
        %v260 = vsel %vm259, %v256, 0.0
        %261 = vadd.xlane.f32.xlu0 %v260
        %v262 = vpop.xlane.xlu0 %261
        %v263 = vrcp.pop 32.0
        %v264 = vmul.f32 %v262, %v263
        %v265 = vsub.f32 %v256, %v264
        %v266 = vmul.f32 %v265, %v265
        %v267 = vsel %vm259, %v266, 0.0
        %268 = vadd.xlane.f32.xlu0 %v267
        %v269 = vpop.xlane.xlu0 %268
        %v270 = vmul.f32 %v269, 0.032258064
        %v271 = vrsqrt.pop %v270
        %v272 = vmul.f32 %v270, %v271
        %vm273 = vcmp.eq.f32.partialorder %v270, inf
        %v274 = vsel %vm273, %v270, %v272
        %vm275 = vcmp.eq.f32.partialorder %v270, 0.0
        %v276 = vand.u32 %v270, 2147483648
        %v277 = vsel %vm275, %v276, %v274
        %v278 = vadd.f32 %v277, 1e-06
        %v279 = vrcp.pop %v278
        %v280 = vmul.f32 %v278, %v279
        %v281 = vsub.f32 2.0, %v280
        %v282 = vmul.f32 %v279, %v281
        %v284 = vlaneseq
        %v285 = vshrl.u32 %v284, 7
        %v286 = vsub.s32 0, %v285
        %v287 = vrot.slane %v257, %v286
        %v289 = vmul.f32 %v287, %v265
        %v290 = vmul.f32 %v289, %v282
        %v292 = vlaneseq
        %v293 = vshrl.u32 %v292, 7
        %v294 = vsub.s32 0, %v293
        %v295 = vrot.slane %v258, %v294
        %v297 = vadd.f32 %v290, %v295
        %v298 = vpack.c.bf16 %v297, %v297
        %v299 = vld [vmem:[#allocation5] sm:$0xff]
        %v300 = vld [vmem:[#allocation5 + $0x8] sm:$0xff]
        %v301 = vld [vmem:[#allocation5 + $0x10] sm:$0xff]
        %v302 = vld [vmem:[#allocation5 + $0x18] sm:$0xff]
        %v303 = vpack.c.bf16 %v300, %v299
        %v304 = vpack.c.bf16 %v302, %v301
        %v305 = vld [vmem:[%s4] sm:$0x1]
        %v307 = vlaneseq
        %v308 = vshrl.u32 %v307, 7
        %v309 = vsub.s32 0, %v308
        %v310 = vrot.slane %v305, %v309
        %v313 = vsel %vm259, %v298, 0
        %315 = vmatprep.subr.bf16.mxu0 0
        %316 = vmatpush1.bf16.msra.mxu0 %v303
        %317 = vmatprep.subr.bf16.mxu0 0
        %318 = vmatpush1.bf16.msra.mxu0 %v304
        %319 = vmatprep.subr.bf16.mxu0 0
        %320 = vmatpush1.bf16.msra.mxu0 0
        %321 = vmatprep.subr.bf16.mxu0 0
        %322 = vmatpush1.bf16.msra.mxu0 0
        %323 = vmatprep.subr.bf16.mxu0 0
        %324 = vmatpush1.bf16.msra.mxu0 0
        %325 = vmatprep.subr.bf16.mxu0 0
        %326 = vmatpush1.bf16.msra.mxu0 0
        %327 = vmatprep.subr.bf16.mxu0 0
        %328 = vmatpush1.bf16.msra.mxu0 0
        %329 = vmatprep.subr.bf16.mxu0 0
        %330 = vmatpush1.bf16.msra.mxu0 0
        %331 = vmatprep.subr.bf16.mxu0 0
        %332 = vmatpush1.bf16.msra.mxu0 0
        %333 = vmatprep.subr.bf16.mxu0 0
        %334 = vmatpush1.bf16.msra.mxu0 0
        %335 = vmatprep.subr.bf16.mxu0 0
        %336 = vmatpush1.bf16.msra.mxu0 0
        %337 = vmatprep.subr.bf16.mxu0 0
        %338 = vmatpush1.bf16.msra.mxu0 0
        %339 = vmatprep.subr.bf16.mxu0 0
        %340 = vmatpush1.bf16.msra.mxu0 0
        %341 = vmatprep.subr.bf16.mxu0 0
        %342 = vmatpush1.bf16.msra.mxu0 0
        %343 = vmatprep.subr.bf16.mxu0 0
        %344 = vmatpush1.bf16.msra.mxu0 0
        %345 = vmatprep.subr.bf16.mxu0 0
        %346 = vmatpush1.bf16.msra.mxu0 0
        %347 = vmatprep.mubr.bf16.mxu0 0
        %348 = vmatmul.mubr.bf16.gmra.mrb[0].mxu0 %v313
        %v349 = vpop.f32.mrb[0].mxu0
        %v350 = vadd.f32 %v310, %v349
        %v351 = vpop.f32.mrb[0].mxu0
        %v352 = vpop.f32.mrb[0].mxu0
        %v353 = vpop.f32.mrb[0].mxu0
        %354 = vdwg.mxu0
        %vm355 = vcmask 785408
        %356 = vst.msk [vmem:[%s254] sm:$0xff] %vm355, %v350
        %s357 = sand.u32 %s141, 1
        %s358 = scalar_lea.sflag [#allocation4], %s357
        %s359 = sand.u32 %s141, 1
        %s360 = smul.addr %s359, 8
        %s361 = scalar_lea.vmem [#allocation7], %s360
        // Predicated region
        $region49: #{tpu_custom_call.1} parent=39 // pred_check
          %p362 = pneg %p151
        $region50: #{tpu_custom_call.1} parent=39 // pred_check_branch
          %364 = sbr.rel (%p362) target = $region52
        $region51: #{tpu_custom_call.1} parent=39 // pred_region
          %s366 = ssub.s32 128, 128
          %367 = vsyncadd %s358, %s366
          %s368 = smul.addr %s23, 128
          %s369 = scalar_lea.hbm %s5, %s368
          %s371 = sshll.u32 %s361, 4
          %s372 = int_to_ptr.vmem [resolvable:$true] %s371
          %374 = dma.vmem_to_hbm [thread:$0]  %s372, 128, %s369, %s358
        $region52: #{tpu_custom_call.1} parent=39 // pred_fallthru
          _
      $region40: #{tpu_custom_call.1} parent=5 // pred_fallthru
        _
      %p375 = scmp.le.s32.totalorder 2, %s18
      // Predicated region
      $region53: #{tpu_custom_call.1} parent=5 // pred_check
        %p376 = pneg %p375
      $region54: #{tpu_custom_call.1} parent=5 // pred_check_branch
        %378 = sbr.rel (%p376) target = $region56
      $region55: #{tpu_custom_call.1} parent=5 // pred_region
        %s379 = ssub.s32 %s18, 2
        // Predicated region
        $region57: #{tpu_custom_call.1} parent=55 // pred_check
          %p380 = pneg %p157
        $region58: #{tpu_custom_call.1} parent=55 // pred_check_branch
          %382 = sbr.rel (%p380) target = $region60
        $region59: #{tpu_custom_call.1} parent=55 // pred_region
          %s383 = sand.u32 %s142, 1
          %s384 = scalar_lea.sflag [#allocation4], %s383
          %s385 = sand.u32 %s142, 1
          %s386 = smul.addr %s385, 8
          %s387 = scalar_lea.vmem [#allocation7], %s386
          %388 = dma.done %s384, 128
        $region60: #{tpu_custom_call.1} parent=55 // pred_fallthru
          _
      $region56: #{tpu_custom_call.1} parent=5 // pred_fallthru
        _
    $region6: #{tpu_custom_call.1} parent=1 // loop_footer
      %s22 = sadd.s32 1, %s18
    $region7: #{tpu_custom_call.1} parent=1 // loop_footer_branch
      %17 = sbr.rel target = $region3
    $region8: #{tpu_custom_call.1} parent=1 // loop_exit
      _
    %389 = vsyncpa [#allocation3], 1
    %s390 = scalar_lea.sflag [#allocation3], 1
    %391 = vsyncpa %s390, 1
    %392 = vsyncpa [#allocation6], 1
    %393 = vsyncpa [#allocation4], 1
    %s394 = scalar_lea.sflag [#allocation4], 1
    %395 = vsyncpa %s394, 1

</llo_original>
